<compile_context>
chip_gen: v7x
topology: tpu7x:2x2x1
jax: 0.10.0
libtpu: 0.0.40
codegen_flags: <defaults>
</compile_context>

<pallas_src>
import functools

import jax
import jax.numpy as jnp
import numpy as np
from jax.experimental import pallas as pl
from jax.experimental.pallas import tpu as pltpu


# -----------------------------------------------------------------------------
# Kernel: lane-dense flattened Sobel-norm with reflect-101 pad 1.
# Each image is a flat (Lp,) lane row.  Neighbours are +/-W / +/-1 lane rolls;
# reflection at the image border is applied with precomputed position masks.
# Separable Sobel: vertical [1,2,1]/[-1,0,1] pass, then horizontal pass.
# -----------------------------------------------------------------------------
def _sobel_flat_kernel(mask_ref, x_ref, o_ref, *, W):
    f = x_ref[...].astype(jnp.float32)            # (B, Lp)
    Lp = f.shape[1]

    first_row = mask_ref[0:1, :] != 0             # (1, Lp) border masks
    last_row = mask_ref[1:2, :] != 0
    first_col = mask_ref[2:3, :] != 0
    last_col = mask_ref[3:4, :] != 0

    # ---- vertical pass: neighbours one image row (= W lanes) away ------------
    x_up_raw = pltpu.roll(f, W, 1)                # x[pos - W]  (wraps at first row)
    x_dn_raw = pltpu.roll(f, Lp - W, 1)           # x[pos + W]  (wraps at last row)
    x_up = jnp.where(first_row, x_dn_raw, x_up_raw)   # row -1 -> row 1
    x_dn = jnp.where(last_row, x_up_raw, x_dn_raw)    # row H  -> row H-2

    v1 = x_up + 2.0 * f + x_dn                    # vertical [1, 2, 1]
    v2 = x_dn - x_up                              # vertical [-1, 0, 1]

    # ---- horizontal pass: neighbours one column (= 1 lane) away --------------
    v1_l_raw = pltpu.roll(v1, 1, 1)               # v1[pos - 1]
    v1_r_raw = pltpu.roll(v1, Lp - 1, 1)          # v1[pos + 1]
    v2_l_raw = pltpu.roll(v2, 1, 1)
    v2_r_raw = pltpu.roll(v2, Lp - 1, 1)
    v1_l = jnp.where(first_col, v1_r_raw, v1_l_raw)   # col -1 -> col 1
    v1_r = jnp.where(last_col, v1_l_raw, v1_r_raw)    # col W  -> col W-2
    v2_l = jnp.where(first_col, v2_r_raw, v2_l_raw)
    v2_r = jnp.where(last_col, v2_l_raw, v2_r_raw)

    gx = v1_r - v1_l                              # horizontal [-1, 0, 1] on v1
    gy = v2_l + 2.0 * v2 + v2_r                   # horizontal [1, 2, 1] on v2

    o_ref[...] = jnp.sqrt(gx * gx + gy * gy).astype(o_ref.dtype)


# -----------------------------------------------------------------------------
# Generation-aware budget / block sizing.
# -----------------------------------------------------------------------------
def _tpu_target():
    """Returns (vmem_limit_bytes, tensorcores_per_chip) with safe fallbacks."""
    kind = ""
    try:
        kind = jax.devices()[0].device_kind.lower()
    except Exception:
        pass
    vmem_cap = None
    try:
        vmem_cap = int(pltpu.get_tpu_info().vmem_capacity_bytes)
    except Exception:
        vmem_cap = None
    is_v7 = ("v7" in kind) or ("7x" in kind) or (
        vmem_cap is not None and vmem_cap <= 64 * 1024 * 1024)
    if is_v7:
        return 48 * 1024 * 1024, 2                # v7x: 64 MiB VMEM/TC, 2 TCs
    if ("v5" in kind) or ("v6" in kind) or (
            vmem_cap is not None and vmem_cap >= 100 * 1024 * 1024):
        return 64 * 1024 * 1024, 1                # v5e/v6e: 128 MiB VMEM, 1 TC
    return 32 * 1024 * 1024, 1                    # unknown: conservative


def _pick_flat_block(M, bytes_per_image, num_cores, max_block_bytes):
    """Images per grid step for the flattened (M, Lp) layout.

    The image axis is the block's second-minor dim, so it must be a multiple of
    8 or equal to the full M (Mosaic (8,128) block rule).
    """
    if M <= 8:
        return M                                  # tiny problem: one full block
    cap = max(1, max_block_bytes // max(1, bytes_per_image))
    if cap < 8:
        # TODO(synk): row-tile very large images (1-row halo) instead of forcing
        # 8 whole images per block; this can exceed the VMEM budget for huge H*W.
        return 8
    b = max(8, (min(cap, M) // 8) * 8)
    if num_cores >= 2 and M >= 16:
        # v7x megacore: keep >= 2 grid steps and an even step count so both
        # TensorCores (grid axis is "parallel") get the same number of blocks.
        steps = max(2, pl.cdiv(M, b))
        if steps % 2:
            steps += 1
        b = min(b, max(8, ((pl.cdiv(M, steps) + 7) // 8) * 8))
    return min(b, M)


# -----------------------------------------------------------------------------
# Flat-layout driver: (M, H*W) -> (M, H*W) gradient norm with reflect-101 pad 1.
# -----------------------------------------------------------------------------
def _norm_gradient_flat(x_flat, H, W):
    M, L = x_flat.shape
    assert L == H * W and H >= 2 and W >= 2, "reflection pad of 1 needs H, W >= 2"

    # Round the lane dim up to a multiple of 128 so every load/store/roll is
    # full-lane; tail lanes compute garbage and are sliced off below.
    Lp = ((L + 127) // 128) * 128
    if Lp != L:
        x_flat = jnp.pad(x_flat, ((0, 0), (0, Lp - L)))

    # Grid/batch-invariant reflect-101 border masks, built host-side (no
    # per-element integer div/mod inside the kernel).
    pos = np.arange(Lp, dtype=np.int64)
    col = pos % W
    masks = jnp.asarray(np.stack([
        pos < W,                                  # first image row
        (L - W <= pos) & (pos < L),               # last image row
        col == 0,                                 # first column
        col == W - 1,                             # last column
    ]).astype(np.int32))                          # (4, Lp)

    vmem_limit, num_cores = _tpu_target()
    # Footprint ~= 2x double-buffered input + 2x output + ~8 live full-block
    # temporaries => ~14x block bytes; keep payload blocks at a few MiB (HBM
    # roofline plateau) within the generation-specific VMEM limit.
    max_block_bytes = min(4 * 1024 * 1024, vmem_limit // 14)
    B = _pick_flat_block(M, x_flat.dtype.itemsize * Lp, num_cores, max_block_bytes)

    kernel = functools.partial(_sobel_flat_kernel, W=W)
    out = pl.pallas_call(
        kernel,
        out_shape=jax.ShapeDtypeStruct((M, Lp), x_flat.dtype),
        grid_spec=pltpu.PrefetchScalarGridSpec(
            num_scalar_prefetch=0,
            grid=(pl.cdiv(M, B),),
            in_specs=[
                pl.BlockSpec((4, Lp), lambda i: (0, 0)),   # border masks
                pl.BlockSpec((B, Lp), lambda i: (i, 0)),   # images
            ],
            out_specs=pl.BlockSpec((B, Lp), lambda i: (i, 0)),
        ),
        compiler_params=pltpu.CompilerParams(
            dimension_semantics=("parallel",),
            vmem_limit_bytes=vmem_limit,
        ),
    )(masks, x_flat)
    if Lp != L:
        out = out[:, :L]
    return out


def norm_gradient(x, ignore_border=False, return_norm=True):
    """Pallas TPU forward for NormGradient.  x: (N, 1, H, W) float."""
    assert x.ndim == 4 and x.shape[1] == 1, "NormGradient implies single-channel NCHW input"
    if not return_norm:
        # TODO(synk): return_norm=False (channel-concat of gx/gy) not implemented;
        # the module default (return_norm=True) is the exercised path.
        raise NotImplementedError("return_norm=False is not implemented")

    N, C, H, W = x.shape
    M = N * C

    if ignore_border:
        assert H >= 5 and W >= 5, "ignore_border=True needs H, W >= 5 (reflect pad 2 after crop)"
        Hc, Wc = H - 2, W - 2
        xc = x[:, :, 1:-1, 1:-1].reshape(M, Hc * Wc)
        d = _norm_gradient_flat(xc, Hc, Wc).reshape(N, C, Hc, Wc)
        # Reflect-pad-2 Sobel norm on the crop == reflect-pad-1 of the
        # reflect-pad-1 Sobel norm on the crop: the [1,2,1] smoothing is
        # symmetric and the [-1,0,1] derivative antisymmetric about the
        # reflection point, so |grad| one row/col outside the crop equals
        # |grad| one row/col inside it.  Keeps the kernel lane-dense and drops
        # the padded-input HBM pass.
        # TODO(synk): fuse this small output reflect-pad into the kernel.
        return jnp.pad(d, ((0, 0), (0, 0), (1, 1), (1, 1)), mode="reflect")

    return _norm_gradient_flat(x.reshape(M, H * W), H, W).reshape(N, C, H, W)


def _reference(x, ignore_border=False):
    """Pure-JAX reference (lax conv) for sanity checking."""
    if ignore_border:
        x = x[:, :, 1:-1, 1:-1]
        pad = 2
    else:
        pad = 1
    xpad = jnp.pad(x, ((0, 0), (0, 0), (pad, pad), (pad, pad)), mode="reflect")
    sobel_x = jnp.array([[-1, 0, 1], [-2, 0, 2], [-1, 0, 1]], jnp.float32).reshape(1, 1, 3, 3)
    sobel_y = jnp.array([[-1, -2, -1], [0, 0, 0], [1, 2, 1]], jnp.float32).reshape(1, 1, 3, 3)
    dn = jax.lax.conv_dimension_numbers(xpad.shape, sobel_x.shape, ("NCHW", "OIHW", "NCHW"))
    gx = jax.lax.conv_general_dilated(xpad, sobel_x, (1, 1), "VALID", dimension_numbers=dn)
    gy = jax.lax.conv_general_dilated(xpad, sobel_y, (1, 1), "VALID", dimension_numbers=dn)
    return jnp.sqrt(gx ** 2 + gy ** 2)


if __name__ == "__main__":
    key = jax.random.PRNGKey(0)
    x = jax.random.normal(key, (2, 1, 16, 16), dtype=jnp.float32)

    # Default path (ignore_border=False, return_norm=True).
    out = jax.block_until_ready(norm_gradient(x))
    ref = _reference(x)
    assert out.shape == (2, 1, 16, 16), out.shape
    assert jnp.allclose(out, ref, atol=1e-5, rtol=1e-5), float(jnp.max(jnp.abs(out - ref)))

    # Non-default ignore_border path (also lane-dense now).
    out_ib = jax.block_until_ready(norm_gradient(x, ignore_border=True))
    ref_ib = _reference(x, ignore_border=True)
    assert out_ib.shape == (2, 1, 16, 16), out_ib.shape
    assert jnp.allclose(out_ib, ref_ib, atol=1e-5, rtol=1e-5), float(jnp.max(jnp.abs(out_ib - ref_ib)))

    print("KERNEL_OK")
</pallas_src>

<mosaic_0001>
module attributes {stable_mosaic.version = 11 : i64} {
  func.func @_sobel_flat_kernel(%arg0: i32, %arg1: memref<4x256xi32, #tpu.memory_space<vmem>>, %arg2: memref<2x256xf32, #tpu.memory_space<vmem>>, %arg3: memref<2x256xf32, #tpu.memory_space<vmem>>) attributes {dimension_semantics = [#tpu.dimension_semantics<parallel>], iteration_bounds = array<i64: 1>, scalar_prefetch = 0 : i64, scratch_operands = 0 : i64, tpu.core_type = #tpu.core_type<tc>, window_params = [{pipeline_mode = #tpu.pipeline_mode<synchronous>, transform_indices = @transform_0, window_bounds = array<i64: 4, 256>}, {transform_indices = @transform_1, window_bounds = array<i64: 2, 256>}, {transform_indices = @transform_2, window_bounds = array<i64: 2, 256>}]} {
    %c0 = arith.constant 0 : index
    %c0_0 = arith.constant 0 : index
    %0 = vector.load %arg2[%c0, %c0_0] : memref<2x256xf32, #tpu.memory_space<vmem>>, vector<2x256xf32>
    %c0_1 = arith.constant 0 : index
    %c0_2 = arith.constant 0 : index
    %1 = vector.load %arg1[%c0_1, %c0_2] : memref<4x256xi32, #tpu.memory_space<vmem>>, vector<1x256xi32>
    %c0_i32 = arith.constant 0 : i32
    %2 = vector.broadcast %c0_i32 : i32 to vector<1x256xi32>
    %3 = arith.cmpi ne, %1, %2 : vector<1x256xi32>
    %c1 = arith.constant 1 : index
    %c0_3 = arith.constant 0 : index
    %4 = vector.load %arg1[%c1, %c0_3] : memref<4x256xi32, #tpu.memory_space<vmem>>, vector<1x256xi32>
    %c0_i32_4 = arith.constant 0 : i32
    %5 = vector.broadcast %c0_i32_4 : i32 to vector<1x256xi32>
    %6 = arith.cmpi ne, %4, %5 : vector<1x256xi32>
    %c2 = arith.constant 2 : index
    %c0_5 = arith.constant 0 : index
    %7 = vector.load %arg1[%c2, %c0_5] : memref<4x256xi32, #tpu.memory_space<vmem>>, vector<1x256xi32>
    %c0_i32_6 = arith.constant 0 : i32
    %8 = vector.broadcast %c0_i32_6 : i32 to vector<1x256xi32>
    %9 = arith.cmpi ne, %7, %8 : vector<1x256xi32>
    %c3 = arith.constant 3 : index
    %c0_7 = arith.constant 0 : index
    %10 = vector.load %arg1[%c3, %c0_7] : memref<4x256xi32, #tpu.memory_space<vmem>>, vector<1x256xi32>
    %c0_i32_8 = arith.constant 0 : i32
    %11 = vector.broadcast %c0_i32_8 : i32 to vector<1x256xi32>
    %12 = arith.cmpi ne, %10, %11 : vector<1x256xi32>
    %c16_i32 = arith.constant 16 : i32
    %13 = tpu.dynamic_rotate %0 by %c16_i32 dim 1 : vector<2x256xf32>, i32 -> vector<2x256xf32>
    %c240_i32 = arith.constant 240 : i32
    %14 = tpu.dynamic_rotate %0 by %c240_i32 dim 1 : vector<2x256xf32>, i32 -> vector<2x256xf32>
    %15 = vector.shape_cast %3 : vector<1x256xi1> to vector<1x256xi1>
    %16 = vector.broadcast %15 : vector<1x256xi1> to vector<2x256xi1>
    %17 = arith.select %16, %14, %13 : vector<2x256xi1>, vector<2x256xf32>
    %18 = vector.shape_cast %6 : vector<1x256xi1> to vector<1x256xi1>
    %19 = vector.broadcast %18 : vector<1x256xi1> to vector<2x256xi1>
    %20 = arith.select %19, %13, %14 : vector<2x256xi1>, vector<2x256xf32>
    %cst = arith.constant 2.000000e+00 : f32
    %21 = vector.broadcast %cst : f32 to vector<2x256xf32>
    %22 = arith.mulf %21, %0 : vector<2x256xf32>
    %23 = arith.addf %17, %22 : vector<2x256xf32>
    %24 = arith.addf %23, %20 : vector<2x256xf32>
    %25 = arith.subf %20, %17 : vector<2x256xf32>
    %c1_i32 = arith.constant 1 : i32
    %26 = tpu.dynamic_rotate %24 by %c1_i32 dim 1 : vector<2x256xf32>, i32 -> vector<2x256xf32>
    %c255_i32 = arith.constant 255 : i32
    %27 = tpu.dynamic_rotate %24 by %c255_i32 dim 1 : vector<2x256xf32>, i32 -> vector<2x256xf32>
    %c1_i32_9 = arith.constant 1 : i32
    %28 = tpu.dynamic_rotate %25 by %c1_i32_9 dim 1 : vector<2x256xf32>, i32 -> vector<2x256xf32>
    %c255_i32_10 = arith.constant 255 : i32
    %29 = tpu.dynamic_rotate %25 by %c255_i32_10 dim 1 : vector<2x256xf32>, i32 -> vector<2x256xf32>
    %30 = vector.shape_cast %9 : vector<1x256xi1> to vector<1x256xi1>
    %31 = vector.broadcast %30 : vector<1x256xi1> to vector<2x256xi1>
    %32 = arith.select %31, %27, %26 : vector<2x256xi1>, vector<2x256xf32>
    %33 = vector.shape_cast %12 : vector<1x256xi1> to vector<1x256xi1>
    %34 = vector.broadcast %33 : vector<1x256xi1> to vector<2x256xi1>
    %35 = arith.select %34, %26, %27 : vector<2x256xi1>, vector<2x256xf32>
    %36 = vector.shape_cast %9 : vector<1x256xi1> to vector<1x256xi1>
    %37 = vector.broadcast %36 : vector<1x256xi1> to vector<2x256xi1>
    %38 = arith.select %37, %29, %28 : vector<2x256xi1>, vector<2x256xf32>
    %39 = vector.shape_cast %12 : vector<1x256xi1> to vector<1x256xi1>
    %40 = vector.broadcast %39 : vector<1x256xi1> to vector<2x256xi1>
    %41 = arith.select %40, %28, %29 : vector<2x256xi1>, vector<2x256xf32>
    %42 = arith.subf %35, %32 : vector<2x256xf32>
    %cst_11 = arith.constant 2.000000e+00 : f32
    %43 = vector.broadcast %cst_11 : f32 to vector<2x256xf32>
    %44 = arith.mulf %43, %25 : vector<2x256xf32>
    %45 = arith.addf %38, %44 : vector<2x256xf32>
    %46 = arith.addf %45, %41 : vector<2x256xf32>
    %47 = arith.mulf %42, %42 : vector<2x256xf32>
    %48 = arith.mulf %46, %46 : vector<2x256xf32>
    %49 = arith.addf %47, %48 : vector<2x256xf32>
    %50 = math.sqrt %49 : vector<2x256xf32>
    %c0_12 = arith.constant 0 : index
    %c0_13 = arith.constant 0 : index
    %51 = vector.load %arg3[%c0_12, %c0_13] : memref<2x256xf32, #tpu.memory_space<vmem>>, vector<2x256xf32>
    tpu.vector_store %arg3[%c0_12, %c0_13], %50 {strides = array<i32>} : memref<2x256xf32, #tpu.memory_space<vmem>>, vector<2x256xf32>,
    return
  }
  func.func @transform_0(%arg0: i32) -> (i32, i32) {
    %c0_i32 = arith.constant 0 : i32
    %c0_i32_0 = arith.constant 0 : i32
    %c0_i32_1 = arith.constant 0 : i32
    return %c0_i32, %c0_i32_0 : i32, i32
  }
  func.func @transform_1(%arg0: i32) -> (i32, i32) {
    %c0_i32 = arith.constant 0 : i32
    %c0_i32_0 = arith.constant 0 : i32
    return %arg0, %c0_i32 : i32, i32
  }
  func.func @transform_2(%arg0: i32) -> (i32, i32) {
    %c0_i32 = arith.constant 0 : i32
    %c0_i32_0 = arith.constant 0 : i32
    return %arg0, %c0_i32 : i32, i32
  }
}

</mosaic_0001>

<llo_original>
// kernel: tpu_custom_call.1
$region0: #{tpu_custom_call.1}
  #allocation0 [shape = 'u32[]', space=smem, size = 0x4, offset = 0x4, fixed_abs, tag = 'smem constant byte address 0x4 - core index']
  #allocation1 [shape = 'u32[144,128]{1,0:T(1,128)}', space=vmem, size = 0x12000, scoped, tag = 'internal scratch']
  %s0 = inlined_call_operand.hbm [shape: s32[4,256], index: 0, kind: input, shape index: {}]
  %s1 = inlined_call_operand.hbm [shape: f32[2,256], index: 1, kind: input, shape index: {}]
  %s2 = inlined_call_operand.hbm [shape: f32[2,256], index: 2, kind: output, shape index: {}]
  %s3 = sld [smem:[#allocation0]]
  $region26: #{tpu_custom_call.1} parent=0
    _
  %s5 = ssub.s32 1, %s3
  %s6 = scalar_select 0, %s5, %s3
  $region1: #{tpu_custom_call.1} parent=0
    #allocation2 [shape = 'u8[4096]{0}', space=vmem, size = 0x1000, scoped, tag = 'input window, operand 0, single buffered']
    #allocation3 [shape = 's32[1]{0}', space=sflag, size = 0x4, scoped, tag = 'scoped memory for tpu_custom_call.1']
    #allocation4 [shape = 's32[1]{0}', space=sflag, size = 0x4, scoped, tag = 'scoped memory for tpu_custom_call.1']
    #allocation5 [shape = 'u8[2048]{0}', space=vmem, size = 0x800, scoped, tag = 'input window, operand 1, single buffered']
    #allocation6 [shape = 's32[1]{0}', space=sflag, size = 0x4, scoped, tag = 'scoped memory for tpu_custom_call.1']
    #allocation7 [shape = 'u8[2048]{0}', space=vmem, size = 0x800, scoped, tag = 'output window, operand 0, single buffered']
    %7 = vsyncpa [#allocation3], 0
    %8 = vsyncpa [#allocation6], 0
    %9 = vsyncpa [#allocation4], 0
    // Predicated region
    $region2: #{tpu_custom_call.1} parent=1 // pred_check
      _
    $region3: #{tpu_custom_call.1} parent=1 // pred_check_branch
      %11 = sbr.rel (0) target = $region5
    $region4: #{tpu_custom_call.1} parent=1 // pred_region
      %s13 = ssub.s32 128, 128
      %14 = vsyncadd [#allocation3], %s13
      %s16 = sshll.u32 [#allocation2], 4
      %s17 = int_to_ptr.vmem [resolvable:$true] %s16
      %19 = dma.hbm_to_vmem [thread:$0]  %s0, 128, %s17, [#allocation3]
    $region5: #{tpu_custom_call.1} parent=1 // pred_fallthru
      _
    // Predicated region
    $region6: #{tpu_custom_call.1} parent=1 // pred_check
      _
    $region7: #{tpu_custom_call.1} parent=1 // pred_check_branch
      %21 = sbr.rel (0) target = $region9
    $region8: #{tpu_custom_call.1} parent=1 // pred_region
      %s23 = ssub.s32 64, 64
      %24 = vsyncadd [#allocation6], %s23
      %s26 = sshll.u32 [#allocation5], 4
      %s27 = int_to_ptr.vmem [resolvable:$true] %s26
      %29 = dma.hbm_to_vmem [thread:$0]  %s1, 64, %s27, [#allocation6]
    $region9: #{tpu_custom_call.1} parent=1 // pred_fallthru
      _
    // Predicated region
    $region10: #{tpu_custom_call.1} parent=1 // pred_check
      _
    $region11: #{tpu_custom_call.1} parent=1 // pred_check_branch
      %31 = sbr.rel (0) target = $region13
    $region12: #{tpu_custom_call.1} parent=1 // pred_region
      %32 = dma.done [#allocation3], 128
    $region13: #{tpu_custom_call.1} parent=1 // pred_fallthru
      _
    // Predicated region
    $region14: #{tpu_custom_call.1} parent=1 // pred_check
      _
    $region15: #{tpu_custom_call.1} parent=1 // pred_check_branch
      %34 = sbr.rel (0) target = $region17
    $region16: #{tpu_custom_call.1} parent=1 // pred_region
      %35 = dma.done [#allocation6], 64
    $region17: #{tpu_custom_call.1} parent=1 // pred_fallthru
      _
    %v36 = vld [vmem:[#allocation5] sm:$0xf]
    %v37 = vld [vmem:[#allocation2] ss:$4 sm:$0x3]
    %vm38 = vcmp.ne.s32.totalorder %v37, 0
    %s39 = scalar_lea.vmem [#allocation2], 1
    %v40 = vld [vmem:[%s39] ss:$4 sm:$0x3]
    %vm41 = vcmp.ne.s32.totalorder %v40, 0
    %s42 = scalar_lea.vmem [#allocation2], 2
    %v43 = vld [vmem:[%s42] ss:$4 sm:$0x3]
    %vm44 = vcmp.ne.s32.totalorder %v43, 0
    %s45 = scalar_lea.vmem [#allocation2], 3
    %v46 = vld [vmem:[%s45] ss:$4 sm:$0x3]
    %vm47 = vcmp.ne.s32.totalorder %v46, 0
    %v50 = vunpack.c.l.s4 1983009808
    %v51 = vunpack.c.0.s8 %v50
    %v52 = vlaneseq
    %v53 = vshrl.u32 %v52, 7
    %v54 = vsub.s32 %v51, %v53
    %v55 = vrot.slane %v36, %v54
    %v56 = vcombine.high %v55, %v55
    %59 = vrot.lane.b32.xlu0 %v55, 16
    %v60 = vpop.permute.xlu0 %59
    %61 = vrot.lane.b32.xlu0 %v56, 16
    %v62 = vpop.permute.xlu0 %61
    %v63 = vlaneseq
    %v64 = vand.u32 %v63, 127
    %vm65 = vcmp.lt.s32.totalorder %v64, 16
    %v66 = vsel %vm65, %v60, %v62
    %v67 = vsel %vm65, %v62, %v60
    %68 = vrot.lane.b32.xlu0 %v55, 112
    %v69 = vpop.permute.xlu0 %68
    %70 = vrot.lane.b32.xlu0 %v56, 112
    %v71 = vpop.permute.xlu0 %70
    %vm72 = vcmp.lt.s32.totalorder %v64, 112
    %v73 = vsel %vm72, %v69, %v71
    %v74 = vsel %vm72, %v71, %v69
    %v75 = vsel %vm38, 1, 0
    %v76 = vlaneseq
    %v77 = vshrl.u32 %v76, 7
    %v78 = vsub.s32 0, %v77
    %v79 = vrot.slane %v75, %v78
    %v80 = vlaneseq
    %v81 = vshrl.u32 %v80, 7
    %v82 = vsub.s32 1, %v81
    %v83 = vrot.slane %v75, %v82
    %vm84 = vcmp.eq.s32.totalorder %v79, 1
    %vm85 = vcmp.eq.s32.totalorder %v83, 1
    %v86 = vsel %vm84, %v73, %v67
    %v87 = vsel %vm85, %v74, %v66
    %v88 = vsel %vm41, 1, 0
    %v89 = vlaneseq
    %v90 = vshrl.u32 %v89, 7
    %v91 = vsub.s32 0, %v90
    %v92 = vrot.slane %v88, %v91
    %v93 = vlaneseq
    %v94 = vshrl.u32 %v93, 7
    %v95 = vsub.s32 1, %v94
    %v96 = vrot.slane %v88, %v95
    %vm97 = vcmp.eq.s32.totalorder %v92, 1
    %vm98 = vcmp.eq.s32.totalorder %v96, 1
    %v99 = vsel %vm97, %v67, %v73
    %v100 = vsel %vm98, %v66, %v74
    %v101 = vmul.f32 %v36, 2.0
    %v104 = vunpack.c.l.s4 1983009808
    %v105 = vunpack.c.0.s8 %v104
    %v106 = vlaneseq
    %v107 = vshrl.u32 %v106, 7
    %v108 = vsub.s32 %v105, %v107
    %v109 = vrot.slane %v101, %v108
    %v110 = vcombine.high %v109, %v109
    %v113 = vadd.f32 %v86, %v109
    %v114 = vadd.f32 %v87, %v110
    %v115 = vadd.f32 %v113, %v99
    %v116 = vadd.f32 %v114, %v100
    %v117 = vsub.f32 %v99, %v86
    %v118 = vsub.f32 %v100, %v87
    %119 = vrot.lane.b32.xlu0 %v115, 1
    %v120 = vpop.permute.xlu0 %119
    %121 = vrot.lane.b32.xlu0 %v116, 1
    %v122 = vpop.permute.xlu0 %121
    %vm123 = vcmp.lt.s32.totalorder %v64, 1
    %v124 = vsel %vm123, %v120, %v122
    %v125 = vsel %vm123, %v122, %v120
    %126 = vrot.lane.b32.xlu0 %v115, 127
    %v127 = vpop.permute.xlu0 %126
    %128 = vrot.lane.b32.xlu0 %v116, 127
    %v129 = vpop.permute.xlu0 %128
    %vm130 = vcmp.lt.s32.totalorder %v64, 127
    %v131 = vsel %vm130, %v127, %v129
    %v132 = vsel %vm130, %v129, %v127
    %133 = vrot.lane.b32.xlu0 %v117, 1
    %v134 = vpop.permute.xlu0 %133
    %135 = vrot.lane.b32.xlu0 %v118, 1
    %v136 = vpop.permute.xlu0 %135
    %v137 = vsel %vm123, %v134, %v136
    %v138 = vsel %vm123, %v136, %v134
    %139 = vrot.lane.b32.xlu0 %v117, 127
    %v140 = vpop.permute.xlu0 %139
    %141 = vrot.lane.b32.xlu0 %v118, 127
    %v142 = vpop.permute.xlu0 %141
    %v143 = vsel %vm130, %v140, %v142
    %v144 = vsel %vm130, %v142, %v140
    %v145 = vsel %vm44, 1, 0
    %v146 = vlaneseq
    %v147 = vshrl.u32 %v146, 7
    %v148 = vsub.s32 0, %v147
    %v149 = vrot.slane %v145, %v148
    %v150 = vlaneseq
    %v151 = vshrl.u32 %v150, 7
    %v152 = vsub.s32 1, %v151
    %v153 = vrot.slane %v145, %v152
    %vm154 = vcmp.eq.s32.totalorder %v149, 1
    %vm155 = vcmp.eq.s32.totalorder %v153, 1
    %v156 = vsel %vm154, %v131, %v125
    %v157 = vsel %vm155, %v132, %v124
    %v158 = vsel %vm47, 1, 0
    %v159 = vlaneseq
    %v160 = vshrl.u32 %v159, 7
    %v161 = vsub.s32 0, %v160
    %v162 = vrot.slane %v158, %v161
    %v163 = vlaneseq
    %v164 = vshrl.u32 %v163, 7
    %v165 = vsub.s32 1, %v164
    %v166 = vrot.slane %v158, %v165
    %vm167 = vcmp.eq.s32.totalorder %v162, 1
    %vm168 = vcmp.eq.s32.totalorder %v166, 1
    %v169 = vsel %vm167, %v125, %v131
    %v170 = vsel %vm168, %v124, %v132
    %v171 = vsel %vm154, %v143, %v138
    %v172 = vsel %vm155, %v144, %v137
    %v173 = vsel %vm167, %v138, %v143
    %v174 = vsel %vm168, %v137, %v144
    %v175 = vsub.f32 %v169, %v156
    %v176 = vsub.f32 %v170, %v157
    %v177 = vmul.f32 %v117, 2.0
    %v178 = vmul.f32 %v118, 2.0
    %v179 = vadd.f32 %v171, %v177
    %v180 = vadd.f32 %v172, %v178
    %v181 = vadd.f32 %v179, %v173
    %v182 = vadd.f32 %v180, %v174
    %v183 = vmul.f32 %v175, %v175
    %v184 = vmul.f32 %v176, %v176
    %v185 = vmul.f32 %v181, %v181
    %v186 = vmul.f32 %v182, %v182
    %v187 = vadd.f32 %v183, %v185
    %v188 = vadd.f32 %v184, %v186
    %v189 = vrsqrt.pop %v187
    %v190 = vmul.f32 %v187, %v189
    %vm191 = vcmp.eq.f32.partialorder %v187, inf
    %v192 = vsel %vm191, %v187, %v190
    %vm193 = vcmp.eq.f32.partialorder %v187, 0.0
    %v194 = vand.u32 %v187, 2147483648
    %v195 = vsel %vm193, %v194, %v192
    %v196 = vrsqrt.pop %v188
    %v197 = vmul.f32 %v188, %v196
    %vm198 = vcmp.eq.f32.partialorder %v188, inf
    %v199 = vsel %vm198, %v188, %v197
    %vm200 = vcmp.eq.f32.partialorder %v188, 0.0
    %v201 = vand.u32 %v188, 2147483648
    %v202 = vsel %vm200, %v201, %v199
    %v205 = vcombine.low %v195, %v202
    %v207 = vunpack.c.l.s4 1983009808
    %v208 = vunpack.c.0.s8 %v207
    %v209 = vlaneseq
    %v210 = vshrl.u32 %v209, 7
    %v211 = vsub.s32 %v208, %v210
    %v212 = vrot.slane %v205, %v211
    %214 = vst [vmem:[#allocation7] sm:$0xf] %v212
    // Predicated region
    $region18: #{tpu_custom_call.1} parent=1 // pred_check
      _
    $region19: #{tpu_custom_call.1} parent=1 // pred_check_branch
      %216 = sbr.rel (0) target = $region21
    $region20: #{tpu_custom_call.1} parent=1 // pred_region
      %s218 = ssub.s32 64, 64
      %219 = vsyncadd [#allocation4], %s218
      %s221 = sshll.u32 [#allocation7], 4
      %s222 = int_to_ptr.vmem [resolvable:$true] %s221
      %224 = dma.vmem_to_hbm [thread:$0]  %s222, 64, %s2, [#allocation4]
    $region21: #{tpu_custom_call.1} parent=1 // pred_fallthru
      _
    // Predicated region
    $region22: #{tpu_custom_call.1} parent=1 // pred_check
      _
    $region23: #{tpu_custom_call.1} parent=1 // pred_check_branch
      %226 = sbr.rel (0) target = $region25
    $region24: #{tpu_custom_call.1} parent=1 // pred_region
      %227 = dma.done [#allocation4], 64
    $region25: #{tpu_custom_call.1} parent=1 // pred_fallthru
      _
    %228 = vsyncpa [#allocation3], 1
    %229 = vsyncpa [#allocation6], 1
    %230 = vsyncpa [#allocation4], 1

</llo_original>
